<compile_context>
chip_gen: v6e
topology: v6e:2x2x1
jax: 0.10.0
libtpu: 0.0.40
codegen_flags: <defaults>
</compile_context>

<pallas_src>
import numpy as np

import jax
import jax.numpy as jnp
from jax.experimental import pallas as pl
from jax.experimental.pallas import tpu as pltpu


def _pos_enc_kernel(row_ref, col_ref, par_ref, out_ref):
    row = row_ref[...]                       # (TN, 1) f32
    col = col_ref[...]                       # (TN, 1) f32
    inv_row = par_ref[0:1, :]                # (1, dim): [inv_base, 0]  (cols >= dim//2 zeroed)
    inv_col = par_ref[1:2, :]                # (1, dim): [0, inv_base]  (cols <  dim//2 zeroed)
    sft = par_ref[2:3, :]                    # (1, dim): [sft, sft]
    arg = row * inv_row + (col * inv_col + sft)   # (TN, dim)
    out_ref[...] = jnp.sin(arg)              # single full-tile store


def _round_up(x, m):
    return ((x + m - 1) // m) * m


def _pick_tile_rows(n, dim):
    # Keep the double-buffered f32 output tile around <= 4 MiB (x2 buffers = 8 MiB),
    # comfortably under the scoped-VMEM defaults on every generation.
    budget_rows = (4 * 1024 * 1024) // max(dim * 4, 1)
    tn = max(8, min(4096, (budget_rows // 8) * 8))
    return min(tn, _round_up(n, 8))


def make_pos_encoding_2d(dim, base=10000.0, bias=0.0):
    """Builds the deterministic parameters exactly as the torch __init__ does and
    returns a forward(row, col) callable backed by a Pallas TPU kernel."""
    assert dim % 2 == 0
    half = dim // 2
    idx = np.arange(half)
    b = 2.0 * (idx - (idx % 2)) / dim
    inv_base = np.power(float(base), b)      # == 1 / (base ** (-b)); torch divides by base**(-b)
    sft = np.where(idx % 2 == 1, np.pi / 2.0 + bias, float(bias))
    zeros = np.zeros_like(inv_base)
    params = np.stack(
        [
            np.concatenate([inv_base, zeros]),   # row-half reciprocal, col-half masked to 0
            np.concatenate([zeros, inv_base]),   # col-half reciprocal, row-half masked to 0
            np.concatenate([sft, sft]),          # phase shift for both halves
        ],
        axis=0,
    ).astype(np.float32)                         # (3, dim)
    params = jnp.asarray(params)

    def forward(row, col):
        # row, col: any shape; flattened to (-1, 1) as in the torch forward.
        row = jnp.asarray(row, jnp.float32).reshape(-1, 1)
        col = jnp.asarray(col, jnp.float32).reshape(-1, 1)
        n = row.shape[0]

        tn = _pick_tile_rows(n, dim)
        n_pad = _round_up(n, tn)
        if n_pad != n:
            pad = n_pad - n
            row = jnp.pad(row, ((0, pad), (0, 0)))
            col = jnp.pad(col, ((0, pad), (0, 0)))

        # NOTE: if dim < 128 the vreg->VMEM stores are lane-masked; for realistic
        # bigg configs (dim a multiple of 128) they are full-width unmasked vst.
        out = pl.pallas_call(
            _pos_enc_kernel,
            out_shape=jax.ShapeDtypeStruct((n_pad, dim), jnp.float32),
            grid=(n_pad // tn,),
            in_specs=[
                pl.BlockSpec((tn, 1), lambda i: (i, 0)),    # row tile
                pl.BlockSpec((tn, 1), lambda i: (i, 0)),    # col tile
                pl.BlockSpec((3, dim), lambda i: (0, 0)),   # packed params (constant -> fetched once)
            ],
            out_specs=pl.BlockSpec((tn, dim), lambda i: (i, 0)),
            compiler_params=pltpu.CompilerParams(
                dimension_semantics=("parallel",),
            ),
            cost_estimate=pl.CostEstimate(
                flops=4 * n_pad * dim,
                transcendentals=n_pad * dim,
                bytes_accessed=n_pad * dim * 4 + n_pad * 2 * 4 + 3 * dim * 4,
            ),
        )(row, col, params)
        return out[:n] if n_pad != n else out

    return forward


def _reference_f64(row, col, dim, base=10000.0, bias=0.0):
    """float64 ground truth of the literal torch formula (divide by base**(-b))."""
    half = dim // 2
    idx = np.arange(half)
    b = 2.0 * (idx - (idx % 2)) / dim
    p = np.power(float(base), -b)            # torch self.base
    sft = np.where(idx % 2 == 1, np.pi / 2.0 + bias, float(bias))
    row = np.asarray(row, np.float64).reshape(-1, 1)
    col = np.asarray(col, np.float64).reshape(-1, 1)
    x = row / p + sft
    y = col / p + sft
    arg = np.concatenate([x, y], axis=-1)
    return np.sin(arg), arg


if __name__ == "__main__":
    dim = 32          # hidden (must be even)
    seq = 8           # number of (row, col) positions

    key = jax.random.PRNGKey(0)
    krow, kcol = jax.random.split(key)
    # integer grid positions, as the module would receive in bigg
    row = jax.random.randint(krow, (seq,), 0, 16).astype(jnp.float32)
    col = jax.random.randint(kcol, (seq,), 0, 16).astype(jnp.float32)

    forward = make_pos_encoding_2d(dim, base=10000.0, bias=0.0)
    out = jax.block_until_ready(forward(row, col))

    # Correctness: compare against a float64 ground truth of the torch formula.
    # The kernel runs in float32; the highest-frequency column can have a sin
    # argument where one f32 ulp already moves the result by ~1e-3, so ANY f32
    # implementation (torch included) is only accurate to a few argument-ulps there.
    ref, arg = _reference_f64(np.asarray(row), np.asarray(col), dim)
    atol = max(1e-4, 8.0 * float(np.max(np.abs(arg))) * float(np.finfo(np.float32).eps))
    np.testing.assert_allclose(np.asarray(out), ref, rtol=0.0, atol=atol)
    assert out.shape == (seq, dim) and out.dtype == jnp.float32

    print("KERNEL_OK")
</pallas_src>

<mosaic_0001>
module attributes {stable_mosaic.version = 11 : i64} {
  func.func @_pos_enc_kernel(%arg0: i32, %arg1: memref<8x1xf32, #tpu.memory_space<vmem>>, %arg2: memref<8x1xf32, #tpu.memory_space<vmem>>, %arg3: memref<3x32xf32, #tpu.memory_space<vmem>>, %arg4: memref<8x32xf32, #tpu.memory_space<vmem>>) attributes {dimension_semantics = [#tpu.dimension_semantics<parallel>], iteration_bounds = array<i64: 1>, scalar_prefetch = 0 : i64, scratch_operands = 0 : i64, tpu.core_type = #tpu.core_type<tc>, window_params = [{transform_indices = @transform_0, window_bounds = array<i64: 8, 1>}, {transform_indices = @transform_1, window_bounds = array<i64: 8, 1>}, {pipeline_mode = #tpu.pipeline_mode<synchronous>, transform_indices = @transform_2, window_bounds = array<i64: 3, 32>}, {transform_indices = @transform_3, window_bounds = array<i64: 8, 32>}]} {
    %c0 = arith.constant 0 : index
    %c0_0 = arith.constant 0 : index
    %0 = vector.load %arg1[%c0, %c0_0] : memref<8x1xf32, #tpu.memory_space<vmem>>, vector<8x1xf32>
    %c0_1 = arith.constant 0 : index
    %c0_2 = arith.constant 0 : index
    %1 = vector.load %arg2[%c0_1, %c0_2] : memref<8x1xf32, #tpu.memory_space<vmem>>, vector<8x1xf32>
    %c0_3 = arith.constant 0 : index
    %c0_4 = arith.constant 0 : index
    %2 = vector.load %arg3[%c0_3, %c0_4] : memref<3x32xf32, #tpu.memory_space<vmem>>, vector<1x32xf32>
    %c1 = arith.constant 1 : index
    %c0_5 = arith.constant 0 : index
    %3 = vector.load %arg3[%c1, %c0_5] : memref<3x32xf32, #tpu.memory_space<vmem>>, vector<1x32xf32>
    %c2 = arith.constant 2 : index
    %c0_6 = arith.constant 0 : index
    %4 = vector.load %arg3[%c2, %c0_6] : memref<3x32xf32, #tpu.memory_space<vmem>>, vector<1x32xf32>
    %5 = vector.broadcast %0 : vector<8x1xf32> to vector<8x32xf32>
    %6 = vector.broadcast %2 : vector<1x32xf32> to vector<8x32xf32>
    %7 = arith.mulf %5, %6 : vector<8x32xf32>
    %8 = vector.broadcast %1 : vector<8x1xf32> to vector<8x32xf32>
    %9 = vector.broadcast %3 : vector<1x32xf32> to vector<8x32xf32>
    %10 = arith.mulf %8, %9 : vector<8x32xf32>
    %11 = vector.broadcast %4 : vector<1x32xf32> to vector<8x32xf32>
    %12 = arith.addf %10, %11 : vector<8x32xf32>
    %13 = arith.addf %7, %12 : vector<8x32xf32>
    %14 = math.sin %13 : vector<8x32xf32>
    %c0_7 = arith.constant 0 : index
    %c0_8 = arith.constant 0 : index
    %15 = vector.load %arg4[%c0_7, %c0_8] : memref<8x32xf32, #tpu.memory_space<vmem>>, vector<8x32xf32>
    tpu.vector_store %arg4[%c0_7, %c0_8], %14 {strides = array<i32>} : memref<8x32xf32, #tpu.memory_space<vmem>>, vector<8x32xf32>,
    return
  }
  func.func @transform_0(%arg0: i32) -> (i32, i32) {
    %c0_i32 = arith.constant 0 : i32
    %c0_i32_0 = arith.constant 0 : i32
    return %arg0, %c0_i32 : i32, i32
  }
  func.func @transform_1(%arg0: i32) -> (i32, i32) {
    %c0_i32 = arith.constant 0 : i32
    %c0_i32_0 = arith.constant 0 : i32
    return %arg0, %c0_i32 : i32, i32
  }
  func.func @transform_2(%arg0: i32) -> (i32, i32) {
    %c0_i32 = arith.constant 0 : i32
    %c0_i32_0 = arith.constant 0 : i32
    %c0_i32_1 = arith.constant 0 : i32
    return %c0_i32, %c0_i32_0 : i32, i32
  }
  func.func @transform_3(%arg0: i32) -> (i32, i32) {
    %c0_i32 = arith.constant 0 : i32
    %c0_i32_0 = arith.constant 0 : i32
    return %arg0, %c0_i32 : i32, i32
  }
}

</mosaic_0001>

<llo_original>
// kernel: tpu_custom_call.1
$region0: #{tpu_custom_call.1}
  #allocation0 [shape = 'u32[]', space=smem, size = 0x4, offset = 0x4, fixed_abs, tag = 'smem constant byte address 0x4 - core index']
  #allocation1 [shape = 'u32[144,128]{1,0:T(1,128)}', space=vmem, size = 0x12000, scoped, tag = 'internal scratch']
  %s0 = inlined_call_operand.vmem [shape: f32[8,1], index: 0, kind: input, shape index: {}]
  %s1 = inlined_call_operand.vmem [shape: f32[8,1], index: 1, kind: input, shape index: {}]
  %s2 = inlined_call_operand.vmem [shape: f32[3,32], index: 2, kind: input, shape index: {}]
  %s3 = inlined_call_operand.hbm [shape: f32[8,32], index: 3, kind: output, shape index: {}]
  %s4 = sld [smem:[#allocation0]]
  $region22: #{tpu_custom_call.1} parent=0
    _
  %s6 = ssub.s32 1, %s4
  %s7 = scalar_select 0, %s6, %s4
  $region1: #{tpu_custom_call.1} parent=0
    #allocation2 [shape = 'u8[4096]{0}', space=vmem, size = 0x1000, scoped, tag = 'output window, operand 0, single buffered']
    #allocation3 [shape = 's32[1]{0}', space=sflag, size = 0x4, scoped, tag = 'scoped memory for tpu_custom_call.1']
    %8 = vsyncpa [#allocation3], 0
    // Predicated region
    $region2: #{tpu_custom_call.1} parent=1 // pred_check
      _
    $region3: #{tpu_custom_call.1} parent=1 // pred_check_branch
      %10 = sbr.rel (0) target = $region5
    $region4: #{tpu_custom_call.1} parent=1 // pred_region
      _
    $region5: #{tpu_custom_call.1} parent=1 // pred_fallthru
      _
    // Predicated region
    $region6: #{tpu_custom_call.1} parent=1 // pred_check
      _
    $region7: #{tpu_custom_call.1} parent=1 // pred_check_branch
      %12 = sbr.rel (0) target = $region9
    $region8: #{tpu_custom_call.1} parent=1 // pred_region
      _
    $region9: #{tpu_custom_call.1} parent=1 // pred_fallthru
      _
    // Predicated region
    $region10: #{tpu_custom_call.1} parent=1 // pred_check
      _
    $region11: #{tpu_custom_call.1} parent=1 // pred_check_branch
      %14 = sbr.rel (0) target = $region13
    $region12: #{tpu_custom_call.1} parent=1 // pred_region
      _
    $region13: #{tpu_custom_call.1} parent=1 // pred_fallthru
      _
    %v15 = vld [vmem:[%s0] sm:$0xff]
    %v16 = vld [vmem:[%s1] sm:$0xff]
    %v17 = vld [vmem:[%s2] sm:$0x1]
    %v18 = vld [vmem:[%s2 + $0x1] sm:$0x1]
    %v19 = vld [vmem:[%s2 + $0x2] sm:$0x1]
    %21 = vset.pattern.permute.xlu0 0
    %22 = vperm.xlu0 %21, %v15
    %v23 = vpop.permute.xlu0 %22
    %v25 = vlaneseq
    %v26 = vshrl.u32 %v25, 7
    %v27 = vsub.s32 0, %v26
    %v28 = vrot.slane %v17, %v27
    %v29 = vmul.f32 %v23, %v28
    %31 = vset.pattern.permute.xlu0 0
    %32 = vperm.xlu0 %31, %v16
    %v33 = vpop.permute.xlu0 %32
    %v35 = vlaneseq
    %v36 = vshrl.u32 %v35, 7
    %v37 = vsub.s32 0, %v36
    %v38 = vrot.slane %v18, %v37
    %v39 = vmul.f32 %v33, %v38
    %v40 = vlaneseq
    %v41 = vshrl.u32 %v40, 7
    %v42 = vsub.s32 0, %v41
    %v43 = vrot.slane %v19, %v42
    %v44 = vadd.f32 %v39, %v43
    %v45 = vadd.f32 %v29, %v44
    %v46 = vand.u32 2147483647, %v45
    %vm47 = vcmp.le.f32.partialorder %v46, 0.7853982
    %vm48 = vcmp.lt.s32.totalorder %v45, 0
    %v49 = vand.u32 %v45, 2139095040
    %v50 = vshrl.u32 %v49, 23
    %v51 = vsub.s32 %v50, 127
    %v52 = vand.u32 2147483647, %v45
    %v53 = vand.u32 %v52, 8388607
    %v54 = vor.u32 %v53, 8388608
    %v55 = vsub.s32 0, %v54
    %v56 = vadd.s32 %v51, 1
    %vm57 = vcmp.gt.s32.totalorder %v56, 0
    %v58 = vsel %vm57, %v56, 0
    %v59 = vshrl.u32 %v58, 5
    %v60 = vand.u32 %v58, 31
    %v61 = vsub.s32 32, %v60
    %v62 = vshrl.u32 683565275, %v61
    %v63 = vshll.u32 683565275, %v60
    %v64 = vshrl.u32 2475754826, %v61
    %v65 = vor.u32 %v63, %v64
    %v66 = vshll.u32 2475754826, %v60
    %v67 = vshrl.u32 2131351028, %v61
    %v68 = vor.u32 %v66, %v67
    %v69 = vshll.u32 2131351028, %v60
    %v70 = vshrl.u32 2102212464, %v61
    %v71 = vor.u32 %v69, %v70
    %v72 = vshll.u32 2102212464, %v60
    %v73 = vshrl.u32 920167782, %v61
    %v74 = vor.u32 %v72, %v73
    %v75 = vshll.u32 920167782, %v60
    %v76 = vshrl.u32 1326507024, %v61
    %v77 = vor.u32 %v75, %v76
    %vm78 = vcmp.lt.s32.totalorder %v59, 1
    %vm79 = vcmp.lt.s32.totalorder %v59, 2
    %vm80 = vcmp.lt.s32.totalorder %v59, 3
    %vm81 = vcmp.lt.s32.totalorder %v59, 4
    %v82 = vsel %vm78, %v62, %v65
    %v83 = vsel %vm81, %v71, 2102212464
    %v84 = vsel %vm80, %v68, %v83
    %v85 = vsel %vm79, %v82, %v84
    %v86 = vsel %vm78, %v65, %v68
    %v87 = vsel %vm81, %v74, 920167782
    %v88 = vsel %vm80, %v71, %v87
    %v89 = vsel %vm79, %v86, %v88
    %v90 = vsel %vm78, %v68, %v71
    %v91 = vsel %vm81, %v77, 1326507024
    %v92 = vsel %vm80, %v74, %v91
    %v93 = vsel %vm79, %v90, %v92
    %v94 = vshll.u32 %v54, 8
    %v95 = vmul.u32.u64.compose %v94, %v93
    %v96 = vextract.low.u32 %v95
    %v97 = vextract.high.u32 %v95
    %v98 = vmul.u32.u64.compose %v94, %v89
    %v99 = vextract.low.u32 %v98
    %v100 = vextract.high.u32 %v98
    %v101 = vmul.u32 %v94, %v85
    %v102 = vadd.s32 %v97, %v99
    %vm103 = vc.u32 %v97, %v99
    %v104 = vadd.s32 %v100, 1
    %v105 = vsel %vm103, %v104, %v100
    %v106 = vadd.s32 %v101, %v105
    %v107 = vadd.s32 %v106, 536870912
    %v108 = vshrl.u32 %v107, 30
    %v109 = vshll.u32 %v108, 30
    %v110 = vsub.s32 %v106, %v109
    %vm111 = vcmp.lt.s32.totalorder %v110, 0
    %v112 = vsub.s32 0, %v110
    %v113 = vsel %vm111, %v112, %v110
    %v114 = vclz %v113
    %v115 = vsub.s32 %v114, 2
    %vm116 = vcmp.gt.s32.totalorder 0, %v115
    %v117 = vsel %vm116, 0, %v115
    %v118 = vsub.s32 32, %v117
    %v119 = vshll.u32 %v110, %v117
    %v120 = vshrl.u32 %v102, %v118
    %v121 = vor.u32 %v119, %v120
    %v122 = vsub.s32 4294967266, %v117
    %v123 = vadd.s32 %v122, 127
    %v124 = vshll.u32 %v123, 23
    %v125 = vor.u32 4788187, %v124
    %v126 = vand.u32 2147483647, %v125
    %v128 = vcvt.s32.f32 %v121
    %v129 = vmul.f32 %v128, %v126
    %v130 = vxor.u32 %v129, 2147483648
    %v131 = vsel %vm48, %v130, %v129
    %v132 = vsub.s32 4, %v108
    %v133 = vsel %vm48, %v132, %v108
    %v134 = vsel %vm47, %v45, %v131
    %v135 = vsel %vm47, 0, %v133
    %v136 = vcosq.f32.pop %v134
    %v137 = vsinq.f32.pop %v134
    %vm138 = vweird.f32 %v45
    %v139 = vadd.s32 %v135, 3
    %v140 = vand.u32 %v139, 3
    %vm141 = vcmp.lt.s32.totalorder %v140, 2
    %vm142 = vcmp.eq.s32.totalorder %v140, 0
    %v143 = vxor.u32 %v137, 2147483648
    %v144 = vsel %vm142, %v136, %v143
    %vm145 = vcmp.eq.s32.totalorder %v140, 2
    %v146 = vxor.u32 %v136, 2147483648
    %v147 = vsel %vm145, %v146, %v137
    %v148 = vsel %vm141, %v144, %v147
    %v149 = vsel %vm138, nan, %v148
    %vm150 = vcmask 261120
    %151 = vst.msk [vmem:[#allocation2] sm:$0xff] %vm150, %v149
    // Predicated region
    $region14: #{tpu_custom_call.1} parent=1 // pred_check
      _
    $region15: #{tpu_custom_call.1} parent=1 // pred_check_branch
      %153 = sbr.rel (0) target = $region17
    $region16: #{tpu_custom_call.1} parent=1 // pred_region
      %s155 = ssub.s32 128, 128
      %156 = vsyncadd [#allocation3], %s155
      %s158 = sshll.u32 [#allocation2], 4
      %s159 = int_to_ptr.vmem [resolvable:$true] %s158
      %161 = dma.vmem_to_hbm [thread:$0]  %s159, 128, %s3, [#allocation3]
    $region17: #{tpu_custom_call.1} parent=1 // pred_fallthru
      _
    // Predicated region
    $region18: #{tpu_custom_call.1} parent=1 // pred_check
      _
    $region19: #{tpu_custom_call.1} parent=1 // pred_check_branch
      %163 = sbr.rel (0) target = $region21
    $region20: #{tpu_custom_call.1} parent=1 // pred_region
      %164 = dma.done [#allocation3], 128
    $region21: #{tpu_custom_call.1} parent=1 // pred_fallthru
      _
    %165 = vsyncpa [#allocation3], 1

</llo_original>
